<compile_context>
chip_gen: v6e
topology: v6e:2x2x1
jax: 0.10.0
libtpu: 0.0.40
codegen_flags: <defaults>
</compile_context>

<pallas_src>
import jax
import jax.numpy as jnp
from jax.experimental import pallas as pl
from jax.experimental.pallas import tpu as pltpu


def _wordlinout_kernel(x_ref, wt_ref, b_ref, o_ref, acc_ref):
    k = pl.program_id(2)

    @pl.when(k == 0)
    def _init():
        acc_ref[...] = jnp.zeros_like(acc_ref)

    acc_ref[...] += jnp.dot(
        x_ref[...], wt_ref[...], preferred_element_type=jnp.float32
    )

    @pl.when(k == pl.num_programs(2) - 1)
    def _finalize():
        # bias tile is (1, tn); broadcasts over the tm sublanes.
        o_ref[...] = (acc_ref[...] + b_ref[...]).astype(o_ref.dtype)


def _round_up(a, m):
    return (a + m - 1) // m * m


def wordlinout(x, weight, bias=None, mask=None, no_mask_log=False,
               tm=128, tn=256, tk=256):
    """WordLinout.forward: scores = x @ weight.T + bias, optional vocab mask.

    x:      (B, indim) float32
    weight: (outdim, indim) float32   (nn.Linear weight layout)
    bias:   (outdim,) float32 or None
    mask:   (B, outdim) or None
    """
    B, D = x.shape
    V, D2 = weight.shape
    assert D == D2, "indim mismatch"
    dtype = x.dtype
    if bias is None:
        bias = jnp.zeros((V,), dtype)

    # Tile sizes: sublane-aligned (mult of 8) rows, lane-aligned (mult of 128) cols.
    tm = min(tm, _round_up(B, 8))
    tn = min(tn, _round_up(V, 128))
    tk = min(tk, _round_up(D, 128))
    Bp, Vp, Dp = _round_up(B, tm), _round_up(V, tn), _round_up(D, tk)

    # Pad / transpose in plain XLA (layout plumbing, not kernel work).
    x_p = jnp.pad(x, ((0, Bp - B), (0, Dp - D)))
    wt_p = jnp.pad(weight.T, ((0, Dp - D), (0, Vp - V)))          # (Dp, Vp)
    b_p = jnp.pad(bias.reshape(1, V), ((0, 0), (0, Vp - V)))      # (1, Vp)

    grid = (Bp // tm, Vp // tn, Dp // tk)

    grid_spec = pltpu.PrefetchScalarGridSpec(
        num_scalar_prefetch=0,
        grid=grid,
        in_specs=[
            pl.BlockSpec((tm, tk), lambda i, j, k: (i, k)),   # x tile
            pl.BlockSpec((tk, tn), lambda i, j, k: (k, j)),   # W.T tile
            pl.BlockSpec((1, tn), lambda i, j, k: (0, j)),    # bias tile
        ],
        out_specs=pl.BlockSpec((tm, tn), lambda i, j, k: (i, j)),
        scratch_shapes=[pltpu.VMEM((tm, tn), jnp.float32)],
    )

    out_p = pl.pallas_call(
        _wordlinout_kernel,
        grid_spec=grid_spec,
        out_shape=jax.ShapeDtypeStruct((Bp, Vp), dtype),
        compiler_params=pltpu.CompilerParams(
            dimension_semantics=("parallel", "parallel", "arbitrary")),
    )(x_p, wt_p, b_p)

    out = out_p[:B, :V]

    # Optional vocabulary mask (elementwise; cheap, stays in XLA so the kernel
    # output tiles remain lane-dense, pure-compute).
    if mask is not None:
        m = mask.astype(dtype)
        out = out * m if no_mask_log else out + jnp.log(m)

    # TODO(synk): cosnorm / _do_cosnorm / _retcosnorm optional branches are not
    # fused into the kernel (pure norm/scale bookkeeping; default flags skip them).
    return out


if __name__ == "__main__":
    key = jax.random.PRNGKey(0)
    k_x, k_w, k_b, k_m = jax.random.split(key, 4)

    # Small shapes implied by the module: x (B, indim), weight (outdim, indim).
    B, indim, outdim = 8, 64, 256

    x = jax.random.normal(k_x, (B, indim), dtype=jnp.float32)
    # nn.Linear-style init: uniform(-0.1, 0.1) weight, zero bias (reset_parameters)
    W = jax.random.uniform(k_w, (outdim, indim), jnp.float32, -0.1, 0.1)
    b = jax.random.normal(k_b, (outdim,), dtype=jnp.float32) * 0.01

    # Default path: no mask.
    out = wordlinout(x, W, b)
    jax.block_until_ready(out)
    ref = x @ W.T + b[None, :]
    assert jnp.allclose(out, ref, atol=1e-5, rtol=1e-5), "linear mismatch"

    # Masked path (multiplicative, _no_mask_log=True).
    mask = (jax.random.uniform(k_m, (B, outdim)) > 0.3).astype(jnp.float32)
    out_m = wordlinout(x, W, b, mask=mask, no_mask_log=True)
    jax.block_until_ready(out_m)
    ref_m = ref * mask
    assert jnp.allclose(out_m, ref_m, atol=1e-5, rtol=1e-5), "masked mismatch"

    print("KERNEL_OK")
</pallas_src>

<mosaic_0001>
module attributes {stable_mosaic.version = 11 : i64} {
  func.func @_wordlinout_kernel(%arg0: i32, %arg1: i32, %arg2: i32, %arg3: memref<8x128xf32, #tpu.memory_space<vmem>>, %arg4: memref<128x256xf32, #tpu.memory_space<vmem>>, %arg5: memref<1x256xf32, #tpu.memory_space<vmem>>, %arg6: memref<8x256xf32, #tpu.memory_space<vmem>>, %arg7: memref<8x256xf32, #tpu.memory_space<vmem>>) attributes {dimension_semantics = [#tpu.dimension_semantics<parallel>, #tpu.dimension_semantics<parallel>, #tpu.dimension_semantics<arbitrary>], iteration_bounds = array<i64: 1, 1, 1>, scalar_prefetch = 0 : i64, scratch_operands = 1 : i64, tpu.core_type = #tpu.core_type<tc>, window_params = [{transform_indices = @transform_0, window_bounds = array<i64: 8, 128>}, {transform_indices = @transform_1, window_bounds = array<i64: 128, 256>}, {transform_indices = @transform_2, window_bounds = array<i64: 1, 256>}, {transform_indices = @transform_3, window_bounds = array<i64: 8, 256>}]} {
    %c0_i32 = arith.constant 0 : i32
    %0 = arith.cmpi eq, %arg2, %c0_i32 : i32
    %1 = arith.extui %0 : i1 to i32
    %c0_i32_0 = arith.constant 0 : i32
    %2 = arith.cmpi ne, %1, %c0_i32_0 : i32
    scf.if %2 {
      %cst_10 = arith.constant 0.000000e+00 : f32
      %12 = vector.broadcast %cst_10 : f32 to vector<8x256xf32>
      %c0_11 = arith.constant 0 : index
      %c0_12 = arith.constant 0 : index
      %13 = vector.load %arg7[%c0_11, %c0_12] : memref<8x256xf32, #tpu.memory_space<vmem>>, vector<8x256xf32>
      tpu.vector_store %arg7[%c0_11, %c0_12], %12 {strides = array<i32>} : memref<8x256xf32, #tpu.memory_space<vmem>>, vector<8x256xf32>,
    } else {
    }
    %c0 = arith.constant 0 : index
    %c0_1 = arith.constant 0 : index
    %3 = vector.load %arg7[%c0, %c0_1] : memref<8x256xf32, #tpu.memory_space<vmem>>, vector<8x256xf32>
    %c0_2 = arith.constant 0 : index
    %c0_3 = arith.constant 0 : index
    %4 = vector.load %arg3[%c0_2, %c0_3] : memref<8x128xf32, #tpu.memory_space<vmem>>, vector<8x128xf32>
    %c0_4 = arith.constant 0 : index
    %c0_5 = arith.constant 0 : index
    %5 = vector.load %arg4[%c0_4, %c0_5] : memref<128x256xf32, #tpu.memory_space<vmem>>, vector<128x256xf32>
    %cst = arith.constant dense<0.000000e+00> : vector<8x256xf32>
    %6 = tpu.matmul %4, %5, %cst {dimension_numbers = #tpu.dot_dimension_numbers<[1], [0], [0], [1], [0, 0, 1, 1], [], []>} : vector<8x128xf32>, vector<128x256xf32>, vector<8x256xf32> -> vector<8x256xf32>
    %7 = arith.addf %3, %6 : vector<8x256xf32>
    %c0_6 = arith.constant 0 : index
    %c0_7 = arith.constant 0 : index
    %8 = vector.load %arg7[%c0_6, %c0_7] : memref<8x256xf32, #tpu.memory_space<vmem>>, vector<8x256xf32>
    tpu.vector_store %arg7[%c0_6, %c0_7], %7 {strides = array<i32>} : memref<8x256xf32, #tpu.memory_space<vmem>>, vector<8x256xf32>,
    %c0_i32_8 = arith.constant 0 : i32
    %9 = arith.cmpi eq, %arg2, %c0_i32_8 : i32
    %10 = arith.extui %9 : i1 to i32
    %c0_i32_9 = arith.constant 0 : i32
    %11 = arith.cmpi ne, %10, %c0_i32_9 : i32
    scf.if %11 {
      %c0_10 = arith.constant 0 : index
      %c0_11 = arith.constant 0 : index
      %12 = vector.load %arg7[%c0_10, %c0_11] : memref<8x256xf32, #tpu.memory_space<vmem>>, vector<8x256xf32>
      %c0_12 = arith.constant 0 : index
      %c0_13 = arith.constant 0 : index
      %13 = vector.load %arg5[%c0_12, %c0_13] : memref<1x256xf32, #tpu.memory_space<vmem>>, vector<1x256xf32>
      %14 = vector.broadcast %13 : vector<1x256xf32> to vector<8x256xf32>
      %15 = arith.addf %12, %14 : vector<8x256xf32>
      %c0_14 = arith.constant 0 : index
      %c0_15 = arith.constant 0 : index
      %16 = vector.load %arg6[%c0_14, %c0_15] : memref<8x256xf32, #tpu.memory_space<vmem>>, vector<8x256xf32>
      tpu.vector_store %arg6[%c0_14, %c0_15], %15 {strides = array<i32>} : memref<8x256xf32, #tpu.memory_space<vmem>>, vector<8x256xf32>,
    } else {
    }
    return
  }
  func.func @transform_0(%arg0: i32, %arg1: i32, %arg2: i32) -> (i32, i32) {
    %c0_i32 = arith.constant 0 : i32
    return %arg0, %arg2 : i32, i32
  }
  func.func @transform_1(%arg0: i32, %arg1: i32, %arg2: i32) -> (i32, i32) {
    %c0_i32 = arith.constant 0 : i32
    return %arg2, %arg1 : i32, i32
  }
  func.func @transform_2(%arg0: i32, %arg1: i32, %arg2: i32) -> (i32, i32) {
    %c0_i32 = arith.constant 0 : i32
    %c0_i32_0 = arith.constant 0 : i32
    return %c0_i32, %arg1 : i32, i32
  }
  func.func @transform_3(%arg0: i32, %arg1: i32, %arg2: i32) -> (i32, i32) {
    %c0_i32 = arith.constant 0 : i32
    return %arg0, %arg1 : i32, i32
  }
}

</mosaic_0001>

<llo_original>
// kernel: tpu_custom_call.1
$region0: #{tpu_custom_call.1}
  #allocation0 [shape = 'u32[]', space=smem, size = 0x4, offset = 0x4, fixed_abs, tag = 'smem constant byte address 0x4 - core index']
  #allocation1 [shape = 'u32[144,128]{1,0:T(1,128)}', space=vmem, size = 0x12000, scoped, tag = 'internal scratch']
  #allocation2 [shape = 'f32[8,256]{1,0:T(8,128)}', space=vmem, size = 0x2000, scoped, tag = 'scratch operand']
  %s0 = inlined_call_operand.hbm [shape: f32[8,128], index: 0, kind: input, shape index: {}]
  %s1 = inlined_call_operand.hbm [shape: f32[128,256], index: 1, kind: input, shape index: {}]
  %s2 = inlined_call_operand.vmem [shape: f32[1,256], index: 2, kind: input, shape index: {}]
  %s3 = inlined_call_operand.hbm [shape: f32[8,256], index: 3, kind: output, shape index: {}]
  %s4 = sld [smem:[#allocation0]]
  $region38: #{tpu_custom_call.1} parent=0
    _
  %s6 = ssub.s32 1, %s4
  %s7 = scalar_select 0, %s6, %s4
  $region1: #{tpu_custom_call.1} parent=0
    #allocation3 [shape = 'u8[4096]{0}', space=vmem, size = 0x1000, scoped, tag = 'input window, operand 0, single buffered']
    #allocation4 [shape = 's32[1]{0}', space=sflag, size = 0x4, scoped, tag = 'scoped memory for tpu_custom_call.1']
    #allocation5 [shape = 's32[1]{0}', space=sflag, size = 0x4, scoped, tag = 'scoped memory for tpu_custom_call.1']
    #allocation6 [shape = 'u8[131072]{0}', space=vmem, size = 0x20000, scoped, tag = 'input window, operand 1, single buffered']
    #allocation7 [shape = 's32[1]{0}', space=sflag, size = 0x4, scoped, tag = 'scoped memory for tpu_custom_call.1']
    #allocation8 [shape = 'u8[8192]{0}', space=vmem, size = 0x2000, scoped, tag = 'output window, operand 0, single buffered']
    %8 = vsyncpa [#allocation4], 0
    %9 = vsyncpa [#allocation7], 0
    %10 = vsyncpa [#allocation5], 0
    // Predicated region
    $region2: #{tpu_custom_call.1} parent=1 // pred_check
      _
    $region3: #{tpu_custom_call.1} parent=1 // pred_check_branch
      %12 = sbr.rel (0) target = $region5
    $region4: #{tpu_custom_call.1} parent=1 // pred_region
      %s14 = ssub.s32 128, 128
      %15 = vsyncadd [#allocation4], %s14
      %s17 = sshll.u32 [#allocation3], 4
      %s18 = int_to_ptr.vmem [resolvable:$true] %s17
      %20 = dma.hbm_to_vmem [thread:$0]  %s0, 128, %s18, [#allocation4]
    $region5: #{tpu_custom_call.1} parent=1 // pred_fallthru
      _
    // Predicated region
    $region6: #{tpu_custom_call.1} parent=1 // pred_check
      _
    $region7: #{tpu_custom_call.1} parent=1 // pred_check_branch
      %22 = sbr.rel (0) target = $region9
    $region8: #{tpu_custom_call.1} parent=1 // pred_region
      %s24 = ssub.s32 4096, 4096
      %25 = vsyncadd [#allocation7], %s24
      %s26 = sshll.u32 [#allocation6], 4
      %s27 = int_to_ptr.vmem [resolvable:$true] %s26
      %32 = dma.hbm_to_vmem [thread:$0]  %s1, 4096, %s27, [#allocation7], 256, 256, 16
    $region9: #{tpu_custom_call.1} parent=1 // pred_fallthru
      _
    // Predicated region
    $region10: #{tpu_custom_call.1} parent=1 // pred_check
      _
    $region11: #{tpu_custom_call.1} parent=1 // pred_check_branch
      %34 = sbr.rel (0) target = $region13
    $region12: #{tpu_custom_call.1} parent=1 // pred_region
      _
    $region13: #{tpu_custom_call.1} parent=1 // pred_fallthru
      _
    // Predicated region
    $region14: #{tpu_custom_call.1} parent=1 // pred_check
      _
    $region15: #{tpu_custom_call.1} parent=1 // pred_check_branch
      %36 = sbr.rel (0) target = $region17
    $region16: #{tpu_custom_call.1} parent=1 // pred_region
      %37 = dma.done [#allocation4], 128
    $region17: #{tpu_custom_call.1} parent=1 // pred_fallthru
      _
    // Predicated region
    $region18: #{tpu_custom_call.1} parent=1 // pred_check
      _
    $region19: #{tpu_custom_call.1} parent=1 // pred_check_branch
      %39 = sbr.rel (0) target = $region21
    $region20: #{tpu_custom_call.1} parent=1 // pred_region
      %40 = dma.done [#allocation7], 4096
    $region21: #{tpu_custom_call.1} parent=1 // pred_fallthru
      _
    %p41 = scmp.eq.s32.totalorder 0, 0
    // Predicated region
    $region22: #{tpu_custom_call.1} parent=1 // pred_check
      %p42 = pneg %p41
    $region23: #{tpu_custom_call.1} parent=1 // pred_check_branch
      %44 = sbr.rel (%p42) target = $region25
    $region24: #{tpu_custom_call.1} parent=1 // pred_region
      %45 = vst [vmem:[#allocation2] sm:$0xff] 0.0
      %46 = vst [vmem:[#allocation2 + $0x8] sm:$0xff] 0.0
    $region25: #{tpu_custom_call.1} parent=1 // pred_fallthru
      _
    %v47 = vld [vmem:[#allocation2] sm:$0xff]
    %v48 = vld [vmem:[#allocation2 + $0x8] sm:$0xff]
    %v49 = vld [vmem:[#allocation3] sm:$0xff]
    %v50 = vld [vmem:[#allocation6] sm:$0xff]
    %v51 = vld [vmem:[#allocation6 + $0x8] sm:$0xff]
    %v52 = vld [vmem:[#allocation6 + $0x10] sm:$0xff]
    %v53 = vld [vmem:[#allocation6 + $0x18] sm:$0xff]
    %v54 = vld [vmem:[#allocation6 + $0x20] sm:$0xff]
    %v55 = vld [vmem:[#allocation6 + $0x28] sm:$0xff]
    %v56 = vld [vmem:[#allocation6 + $0x30] sm:$0xff]
    %v57 = vld [vmem:[#allocation6 + $0x38] sm:$0xff]
    %v58 = vld [vmem:[#allocation6 + $0x40] sm:$0xff]
    %v59 = vld [vmem:[#allocation6 + $0x48] sm:$0xff]
    %v60 = vld [vmem:[#allocation6 + $0x50] sm:$0xff]
    %v61 = vld [vmem:[#allocation6 + $0x58] sm:$0xff]
    %v62 = vld [vmem:[#allocation6 + $0x60] sm:$0xff]
    %v63 = vld [vmem:[#allocation6 + $0x68] sm:$0xff]
    %v64 = vld [vmem:[#allocation6 + $0x70] sm:$0xff]
    %v65 = vld [vmem:[#allocation6 + $0x78] sm:$0xff]
    %v66 = vld [vmem:[#allocation6 + $0x80] sm:$0xff]
    %v67 = vld [vmem:[#allocation6 + $0x88] sm:$0xff]
    %v68 = vld [vmem:[#allocation6 + $0x90] sm:$0xff]
    %v69 = vld [vmem:[#allocation6 + $0x98] sm:$0xff]
    %v70 = vld [vmem:[#allocation6 + $0xa0] sm:$0xff]
    %v71 = vld [vmem:[#allocation6 + $0xa8] sm:$0xff]
    %v72 = vld [vmem:[#allocation6 + $0xb0] sm:$0xff]
    %v73 = vld [vmem:[#allocation6 + $0xb8] sm:$0xff]
    %v74 = vld [vmem:[#allocation6 + $0xc0] sm:$0xff]
    %v75 = vld [vmem:[#allocation6 + $0xc8] sm:$0xff]
    %v76 = vld [vmem:[#allocation6 + $0xd0] sm:$0xff]
    %v77 = vld [vmem:[#allocation6 + $0xd8] sm:$0xff]
    %v78 = vld [vmem:[#allocation6 + $0xe0] sm:$0xff]
    %v79 = vld [vmem:[#allocation6 + $0xe8] sm:$0xff]
    %v80 = vld [vmem:[#allocation6 + $0xf0] sm:$0xff]
    %v81 = vld [vmem:[#allocation6 + $0xf8] sm:$0xff]
    %82 = vmatprep.subr.mxu0 %v81
    %83 = vmatpush1.msra.mxu0 %v80
    %84 = vmatprep.subr.mxu0 %v79
    %85 = vmatpush1.msra.mxu0 %v78
    %86 = vmatprep.subr.mxu0 %v77
    %87 = vmatpush1.msra.mxu0 %v76
    %88 = vmatprep.subr.mxu0 %v75
    %89 = vmatpush1.msra.mxu0 %v74
    %90 = vmatprep.subr.mxu0 %v73
    %91 = vmatpush1.msra.mxu0 %v72
    %92 = vmatprep.subr.mxu0 %v71
    %93 = vmatpush1.msra.mxu0 %v70
    %94 = vmatprep.subr.mxu0 %v69
    %95 = vmatpush1.msra.mxu0 %v68
    %96 = vmatprep.subr.mxu0 %v67
    %97 = vmatpush1.msra.mxu0 %v66
    %98 = vmatprep.subr.mxu0 %v65
    %99 = vmatpush1.msra.mxu0 %v64
    %100 = vmatprep.subr.mxu0 %v63
    %101 = vmatpush1.msra.mxu0 %v62
    %102 = vmatprep.subr.mxu0 %v61
    %103 = vmatpush1.msra.mxu0 %v60
    %104 = vmatprep.subr.mxu0 %v59
    %105 = vmatpush1.msra.mxu0 %v58
    %106 = vmatprep.subr.mxu0 %v57
    %107 = vmatpush1.msra.mxu0 %v56
    %108 = vmatprep.subr.mxu0 %v55
    %109 = vmatpush1.msra.mxu0 %v54
    %110 = vmatprep.subr.mxu0 %v53
    %111 = vmatpush1.msra.mxu0 %v52
    %112 = vmatprep.subr.mxu0 %v51
    %113 = vmatpush1.msra.mxu0 %v50
    %114 = vmatprep.subr.mxu0 0.0
    %115 = vmatpush2.msra.mxu0 0.0
    %116 = vmatprep.subr.mxu0 0.0
    %117 = vmatpush2.msra.mxu0 0.0
    %118 = vmatprep.subr.mxu0 0.0
    %119 = vmatpush2.msra.mxu0 0.0
    %120 = vmatprep.subr.mxu0 0.0
    %121 = vmatpush2.msra.mxu0 0.0
    %122 = vmatprep.subr.mxu0 0.0
    %123 = vmatpush2.msra.mxu0 0.0
    %124 = vmatprep.subr.mxu0 0.0
    %125 = vmatpush2.msra.mxu0 0.0
    %126 = vmatprep.subr.mxu0 0.0
    %127 = vmatpush2.msra.mxu0 0.0
    %128 = vmatprep.subr.mxu0 0.0
    %129 = vmatpush2.msra.mxu0 0.0
    %130 = vmatprep.subr.mxu0 0.0
    %131 = vmatpush2.msra.mxu0 0.0
    %132 = vmatprep.subr.mxu0 0.0
    %133 = vmatpush2.msra.mxu0 0.0
    %134 = vmatprep.subr.mxu0 0.0
    %135 = vmatpush2.msra.mxu0 0.0
    %136 = vmatprep.subr.mxu0 0.0
    %137 = vmatpush2.msra.mxu0 0.0
    %138 = vmatprep.subr.mxu0 0.0
    %139 = vmatpush2.msra.mxu0 0.0
    %140 = vmatprep.subr.mxu0 0.0
    %141 = vmatpush2.msra.mxu0 0.0
    %142 = vmatprep.subr.mxu0 0.0
    %143 = vmatpush2.msra.mxu0 0.0
    %144 = vmatprep.subr.mxu0 0.0
    %145 = vmatpush2.msra.mxu0 0.0
    %146 = vmatprep.mubr.f32.mxu0 0.0
    %147 = vmatmul.mubr.f32.gmra.mxu0 %v49
    %v148 = vpop.f32.mrf.mxu0
    %v149 = vadd.f32 0.0, %v148
    %v150 = vpop.f32.mrf.mxu0
    %v151 = vadd.f32 0.0, %v150
    %152 = vdwg.mxu0
    %v153 = vadd.f32 %v47, %v149
    %v154 = vadd.f32 %v48, %v151
    %155 = vst [vmem:[#allocation2] sm:$0xff] %v153
    %156 = vst [vmem:[#allocation2 + $0x8] sm:$0xff] %v154
    // Predicated region
    $region26: #{tpu_custom_call.1} parent=1 // pred_check
      %p157 = pneg %p41
    $region27: #{tpu_custom_call.1} parent=1 // pred_check_branch
      %159 = sbr.rel (%p157) target = $region29
    $region28: #{tpu_custom_call.1} parent=1 // pred_region
      %v160 = vld [vmem:[#allocation2] sm:$0xff]
      %v161 = vld [vmem:[#allocation2 + $0x8] sm:$0xff]
      %v162 = vld [vmem:[%s2] sm:$0x3]
      %v164 = vlaneseq
      %v165 = vshrl.u32 %v164, 7
      %v166 = vsub.s32 0, %v165
      %v167 = vrot.slane %v162, %v166
      %v168 = vlaneseq
      %v169 = vshrl.u32 %v168, 7
      %v170 = vsub.s32 1, %v169
      %v171 = vrot.slane %v162, %v170
      %v174 = vadd.f32 %v160, %v167
      %v175 = vadd.f32 %v161, %v171
      %176 = vst [vmem:[#allocation8] sm:$0xff] %v174
      %177 = vst [vmem:[#allocation8 + $0x8] sm:$0xff] %v175
    $region29: #{tpu_custom_call.1} parent=1 // pred_fallthru
      _
    // Predicated region
    $region30: #{tpu_custom_call.1} parent=1 // pred_check
      _
    $region31: #{tpu_custom_call.1} parent=1 // pred_check_branch
      %179 = sbr.rel (0) target = $region33
    $region32: #{tpu_custom_call.1} parent=1 // pred_region
      %s181 = ssub.s32 256, 256
      %182 = vsyncadd [#allocation5], %s181
      %s184 = sshll.u32 [#allocation8], 4
      %s185 = int_to_ptr.vmem [resolvable:$true] %s184
      %187 = dma.vmem_to_hbm [thread:$0]  %s185, 256, %s3, [#allocation5]
    $region33: #{tpu_custom_call.1} parent=1 // pred_fallthru
      _
    // Predicated region
    $region34: #{tpu_custom_call.1} parent=1 // pred_check
      _
    $region35: #{tpu_custom_call.1} parent=1 // pred_check_branch
      %189 = sbr.rel (0) target = $region37
    $region36: #{tpu_custom_call.1} parent=1 // pred_region
      %190 = dma.done [#allocation5], 256
    $region37: #{tpu_custom_call.1} parent=1 // pred_fallthru
      _
    %191 = vsyncpa [#allocation4], 1
    %192 = vsyncpa [#allocation7], 1
    %193 = vsyncpa [#allocation5], 1

</llo_original>
